<compile_context>
chip_gen: v7x
topology: tpu7x:2x2x1
jax: 0.10.0
libtpu: 0.0.40
codegen_flags: <defaults>
</compile_context>

<pallas_src>
import functools

import jax
import jax.numpy as jnp
from jax import lax
from jax.experimental import pallas as pl
from jax.experimental.pallas import tpu as pltpu


def _round_up(x, m):
    return (x + m - 1) // m * m


def _choose_batch_block(B, T_p, F_in, D_v, F_out, itemsize):
    """Pick BB (batch rows per grid step) from a VMEM budget."""
    # Bytes of VMEM live per batch row: double-buffered activation/output blocks
    # plus the f32 hidden activation h that feeds tanh.
    per_row = (2 * T_p * (F_in + D_v) * itemsize       # q + values (double buffer)
               + 2 * (D_v + T_p * 128) * itemsize      # ctx + score tiles (double buffer)
               + T_p * F_out * 4)                      # h (f32)
    budget = 8 * 2 ** 20          # conservative: fits v5e/v6e and v7x's 64 MiB VMEM
    bb = max(8, (budget // max(per_row, 1)) // 8 * 8)
    # Keep the tanh input roughly vreg-resident (~160 KiB) so the single EUP
    # slot (tanh/exp), not vld/vst spill traffic, is the binding unit.
    h_cap = max(8, ((160 * 1024) // max(T_p * F_out * 4, 1)) // 8 * 8)
    bb = min(bb, h_cap)
    b_pad8 = _round_up(B, 8)
    # v7x has 2 TensorCores: keep grid length >= 2 whenever the batch allows.
    if b_pad8 >= 16:
        bb = min(bb, _round_up(b_pad8 // 2, 8))
    return min(bb, b_pad8)


def _self_attention_softmax_kernel(t_valid, mxu_dtype,
                                   q_ref, val_ref, w1_ref, b1_ref, vw_ref,
                                   vb_ref, ctx_ref, score_ref):
    # q_ref:   (BB, T, F_in)    val_ref:  (BB, T, D_v)
    # w1_ref:  (F_in, F_out)    b1_ref:   (1, F_out)
    # vw_ref:  (1, F_out)       vb_ref:   (1,) scalar in SMEM
    # ctx_ref: (BB, D_v)        score_ref:(BB, T, 1)
    bb, t, f_in = q_ref.shape

    # ---- hidden = tanh(q @ W1 + b1): MXU matmul over a (BB*T, F_in) slab -----
    q2 = q_ref[...].reshape(bb * t, f_in)          # free reshape (t % 8 == 0)
    w1 = w1_ref[...]
    if mxu_dtype is not None:                      # bf16 MXU operands (v6e/v7x)
        q2 = q2.astype(mxu_dtype)
        w1 = w1.astype(mxu_dtype)
    h = jnp.tanh(
        jnp.dot(q2, w1, preferred_element_type=jnp.float32)
        + b1_ref[...].astype(jnp.float32))                     # (BB*T, F_out) f32

    # ---- score = h @ V.w + V.b: VPU multiply + lane (F_out) reduce -----------
    # (avoids an M=1 MXU matvec and the relayout of h it would force)
    s = jnp.sum(h * vw_ref[...].astype(jnp.float32), axis=-1, keepdims=True)
    s = s + vb_ref[0]                                          # SMEM scalar bias
    s3 = s.reshape(bb, t, 1)                                   # free reshape
    score_ref[...] = s3.astype(score_ref.dtype)

    # ---- numerically-stable softmax over the (sublane) sequence axis ---------
    if t_valid < t:   # static: mask sequence padding added by the wrapper
        valid = lax.broadcasted_iota(jnp.int32, (bb, t, 1), 1) < t_valid
        s3 = jnp.where(valid, s3, -1e30)
    m = jnp.max(s3, axis=1, keepdims=True)
    p = jnp.exp(s3 - m)
    attn = p / jnp.sum(p, axis=1, keepdims=True)               # (BB, T, 1) f32

    # ---- context = sum_T attn * values: VPU broadcast-mul + sublane reduce ---
    # TODO(synk): switch to a batched MXU dot when T*D_v is large enough to be
    #             MXU-bound; this VPU/XLU path is cheaper for small tiles.
    ctx = jnp.sum(attn * val_ref[...].astype(jnp.float32), axis=1)   # (BB, D_v)
    ctx_ref[...] = ctx.astype(ctx_ref.dtype)


def self_attention_softmax(query, values, w1, b1, vw, vb, *, mxu_dtype=None):
    """Forward pass of SelfAttentionSoftmax.

    query: (B, T, F_in)   values: (B, T, D_v)
    w1:    (F_in, F_out)  b1: (F_out,)   vw: (F_out,)   vb: (1,)
    Returns (context_vector (B, D_v), score (B, T, 1)).
    mxu_dtype: set to jnp.bfloat16 on v6e/v7x to run the W1 matmul with bf16
    operands (f32 accumulation); elementwise math stays f32.
    """
    B, T, F_in = query.shape
    Bv, Tv, D_v = values.shape
    assert (B, T) == (Bv, Tv)
    F_in_w, F_out = w1.shape
    assert F_in_w == F_in

    itemsize = jnp.dtype(query.dtype).itemsize
    T_p = _round_up(T, 8)                              # keep reshapes layout-free
    BB = _choose_batch_block(B, T_p, F_in, D_v, F_out, itemsize)
    B_p = _round_up(B, BB)
    grid = (B_p // BB,)

    if (B_p, T_p) != (B, T):                           # zero-pad; padding is masked
        query = jnp.pad(query, ((0, B_p - B), (0, T_p - T), (0, 0)))
        values = jnp.pad(values, ((0, B_p - B), (0, T_p - T), (0, 0)))

    b1_2d = b1.reshape(1, F_out)
    vw_2d = vw.reshape(1, F_out)
    vb_1d = jnp.asarray(vb, jnp.float32).reshape(1)    # SMEM scalar

    # Advisory cost estimate so XLA can schedule around the custom call.
    flops = (2 * B_p * T_p * F_in * F_out      # W1 matmul
             + 2 * B_p * T_p * F_out           # V score contraction
             + 2 * B_p * T_p * D_v             # attn * values reduction
             + 6 * B_p * T_p)                  # softmax arithmetic
    transcendentals = B_p * T_p * (F_out + 1)  # tanh + exp
    bytes_accessed = itemsize * (B_p * T_p * (F_in + D_v) + F_in * F_out
                                 + 2 * F_out + B_p * D_v + B_p * T_p) + 4

    # Explicit VMEM limit with headroom (re-derived per block size; <= 64 MiB so
    # it is valid on v7x as well as v5e/v6e).
    vmem_bytes = (2 * BB * T_p * (F_in + D_v) * itemsize     # activations, dbl-buffered
                  + (F_in + 2) * F_out * itemsize            # weights, single-buffered
                  + 2 * BB * (D_v + T_p * 128) * itemsize    # outputs, dbl-buffered
                  + 4 * BB * T_p * F_out * 4)                # h / softmax temporaries
    vmem_limit = int(min(64 * 2 ** 20, max(16 * 2 ** 20, 2 * vmem_bytes)))

    kernel = functools.partial(_self_attention_softmax_kernel, T, mxu_dtype)

    ctx_p, score_p = pl.pallas_call(
        kernel,
        out_shape=(
            jax.ShapeDtypeStruct((B_p, D_v), query.dtype),      # context
            jax.ShapeDtypeStruct((B_p, T_p, 1), query.dtype),   # score
        ),
        grid_spec=pltpu.PrefetchScalarGridSpec(
            num_scalar_prefetch=0,
            grid=grid,
            in_specs=[
                pl.BlockSpec((BB, T_p, F_in), lambda b: (b, 0, 0)),   # query
                pl.BlockSpec((BB, T_p, D_v), lambda b: (b, 0, 0)),    # values
                pl.BlockSpec((F_in, F_out), lambda b: (0, 0),         # W1 (const)
                             pipeline_mode=pl.Buffered(1)),
                pl.BlockSpec((1, F_out), lambda b: (0, 0),            # b1 (const)
                             pipeline_mode=pl.Buffered(1)),
                pl.BlockSpec((1, F_out), lambda b: (0, 0),            # V.weight (const)
                             pipeline_mode=pl.Buffered(1)),
                pl.BlockSpec(memory_space=pltpu.MemorySpace.SMEM),    # V.bias scalar
            ],
            out_specs=[
                pl.BlockSpec((BB, D_v), lambda b: (b, 0)),
                pl.BlockSpec((BB, T_p, 1), lambda b: (b, 0, 0)),
            ],
        ),
        compiler_params=pltpu.CompilerParams(
            dimension_semantics=("parallel",),
            vmem_limit_bytes=vmem_limit),
        cost_estimate=pl.CostEstimate(
            flops=flops, transcendentals=transcendentals,
            bytes_accessed=bytes_accessed),
    )(query, values, w1, b1_2d, vw_2d, vb_1d)

    return ctx_p[:B], score_p[:B, :T, :]


if __name__ == "__main__":
    # Small shapes consistent with the module: batch=2, seq=8, in_units=32, out_units=64.
    B, T, IN_UNITS, OUT_UNITS = 2, 8, 32, 64
    D_V = IN_UNITS   # values share the query feature width

    key = jax.random.PRNGKey(0)
    kq, kv, kw1, kb1, kvw, kvb = jax.random.split(key, 6)

    query = jax.random.normal(kq, (B, T, IN_UNITS), dtype=jnp.float32)
    values = jax.random.normal(kv, (B, T, D_V), dtype=jnp.float32)

    # Deterministic nn.Linear-style init: U(-1/sqrt(fan_in), 1/sqrt(fan_in)).
    bound1 = 1.0 / (IN_UNITS ** 0.5)
    w1 = jax.random.uniform(kw1, (IN_UNITS, OUT_UNITS), minval=-bound1,
                            maxval=bound1, dtype=jnp.float32)   # transposed vs PyTorch
    b1 = jax.random.uniform(kb1, (OUT_UNITS,), minval=-bound1,
                            maxval=bound1, dtype=jnp.float32)
    bound2 = 1.0 / (OUT_UNITS ** 0.5)
    vw = jax.random.uniform(kvw, (OUT_UNITS,), minval=-bound2,
                            maxval=bound2, dtype=jnp.float32)   # PyTorch V.weight is (1, F_out)
    vb = jax.random.uniform(kvb, (1,), minval=-bound2,
                            maxval=bound2, dtype=jnp.float32)

    context, score = self_attention_softmax(query, values, w1, b1, vw, vb)
    context = jax.block_until_ready(context)
    score = jax.block_until_ready(score)

    # Pure-JAX reference of the PyTorch forward.
    h_ref = jnp.tanh(jnp.einsum('btf,fo->bto', query, w1) + b1)
    score_ref = jnp.einsum('bto,o->bt', h_ref, vw)[..., None] + vb   # (B, T, 1)
    attn_ref = jax.nn.softmax(score_ref, axis=1)
    ctx_ref = jnp.sum(attn_ref * values, axis=1)                     # (B, D_V)

    assert context.shape == (B, D_V)
    assert score.shape == (B, T, 1)
    assert jnp.allclose(score, score_ref, atol=1e-4, rtol=1e-4)
    assert jnp.allclose(context, ctx_ref, atol=1e-4, rtol=1e-4)

    print("KERNEL_OK")
</pallas_src>

<mosaic_0001>
module attributes {stable_mosaic.version = 11 : i64} {
  func.func @_self_attention_softmax_kernel(%arg0: i32, %arg1: memref<8x8x32xf32, #tpu.memory_space<vmem>>, %arg2: memref<8x8x32xf32, #tpu.memory_space<vmem>>, %arg3: memref<32x64xf32, #tpu.memory_space<vmem>>, %arg4: memref<1x64xf32, #tpu.memory_space<vmem>>, %arg5: memref<1x64xf32, #tpu.memory_space<vmem>>, %arg6: memref<1xf32, #tpu.memory_space<smem>>, %arg7: memref<8x32xf32, #tpu.memory_space<vmem>>, %arg8: memref<8x8x1xf32, #tpu.memory_space<vmem>>) attributes {dimension_semantics = [#tpu.dimension_semantics<parallel>], iteration_bounds = array<i64: 1>, scalar_prefetch = 0 : i64, scratch_operands = 0 : i64, tpu.core_type = #tpu.core_type<tc>, window_params = [{transform_indices = @transform_0, window_bounds = array<i64: 8, 8, 32>}, {transform_indices = @transform_1, window_bounds = array<i64: 8, 8, 32>}, {pipeline_mode = #tpu.pipeline_mode<synchronous>, transform_indices = @transform_2, window_bounds = array<i64: 32, 64>}, {pipeline_mode = #tpu.pipeline_mode<synchronous>, transform_indices = @transform_3, window_bounds = array<i64: 1, 64>}, {pipeline_mode = #tpu.pipeline_mode<synchronous>, transform_indices = @transform_4, window_bounds = array<i64: 1, 64>}, {transform_indices = @transform_5, window_bounds = array<i64: 1>}, {transform_indices = @transform_6, window_bounds = array<i64: 8, 32>}, {transform_indices = @transform_7, window_bounds = array<i64: 8, 8, 1>}]} {
    %c0 = arith.constant 0 : index
    %c0_0 = arith.constant 0 : index
    %c0_1 = arith.constant 0 : index
    %0 = vector.load %arg1[%c0, %c0_0, %c0_1] : memref<8x8x32xf32, #tpu.memory_space<vmem>>, vector<8x8x32xf32>
    %1 = vector.shape_cast %0 : vector<8x8x32xf32> to vector<64x32xf32>
    %c0_2 = arith.constant 0 : index
    %c0_3 = arith.constant 0 : index
    %2 = vector.load %arg3[%c0_2, %c0_3] : memref<32x64xf32, #tpu.memory_space<vmem>>, vector<32x64xf32>
    %cst = arith.constant dense<0.000000e+00> : vector<64x64xf32>
    %3 = tpu.matmul %1, %2, %cst {dimension_numbers = #tpu.dot_dimension_numbers<[1], [0], [0], [1], [0, 0, 1, 1], [], []>} : vector<64x32xf32>, vector<32x64xf32>, vector<64x64xf32> -> vector<64x64xf32>
    %c0_4 = arith.constant 0 : index
    %c0_5 = arith.constant 0 : index
    %4 = vector.load %arg4[%c0_4, %c0_5] : memref<1x64xf32, #tpu.memory_space<vmem>>, vector<1x64xf32>
    %5 = vector.broadcast %4 : vector<1x64xf32> to vector<64x64xf32>
    %6 = arith.addf %3, %5 : vector<64x64xf32>
    %7 = math.tanh %6 : vector<64x64xf32>
    %c0_6 = arith.constant 0 : index
    %c0_7 = arith.constant 0 : index
    %8 = vector.load %arg5[%c0_6, %c0_7] : memref<1x64xf32, #tpu.memory_space<vmem>>, vector<1x64xf32>
    %9 = vector.broadcast %8 : vector<1x64xf32> to vector<64x64xf32>
    %10 = arith.mulf %7, %9 : vector<64x64xf32>
    %cst_8 = arith.constant dense<0.000000e+00> : vector<64xf32>
    %11 = vector.multi_reduction <add>, %10, %cst_8 [1] : vector<64x64xf32> to vector<64xf32>
    %12 = vector.shape_cast %11 : vector<64xf32> to vector<64x1xf32>
    %c0_9 = arith.constant 0 : index
    %13 = memref.load %arg6[%c0_9] : memref<1xf32, #tpu.memory_space<smem>>
    %14 = vector.broadcast %13 : f32 to vector<64x1xf32>
    %15 = arith.addf %12, %14 : vector<64x1xf32>
    %16 = vector.shape_cast %15 : vector<64x1xf32> to vector<8x8x1xf32>
    %c0_10 = arith.constant 0 : index
    %c0_11 = arith.constant 0 : index
    %c0_12 = arith.constant 0 : index
    %17 = vector.load %arg8[%c0_10, %c0_11, %c0_12] : memref<8x8x1xf32, #tpu.memory_space<vmem>>, vector<8x8x1xf32>
    tpu.vector_store %arg8[%c0_10, %c0_11, %c0_12], %16 {strides = array<i32>} : memref<8x8x1xf32, #tpu.memory_space<vmem>>, vector<8x8x1xf32>,
    %cst_13 = arith.constant dense<0xFF800000> : vector<8x1xf32>
    %18 = vector.multi_reduction <maximumf>, %16, %cst_13 [1] : vector<8x8x1xf32> to vector<8x1xf32>
    %19 = vector.shape_cast %18 : vector<8x1xf32> to vector<8x1x1xf32>
    %20 = vector.broadcast %19 : vector<8x1x1xf32> to vector<8x8x1xf32>
    %21 = arith.subf %16, %20 : vector<8x8x1xf32>
    %22 = math.exp %21 : vector<8x8x1xf32>
    %cst_14 = arith.constant dense<0.000000e+00> : vector<8x1xf32>
    %23 = vector.multi_reduction <add>, %22, %cst_14 [1] : vector<8x8x1xf32> to vector<8x1xf32>
    %24 = vector.shape_cast %23 : vector<8x1xf32> to vector<8x1x1xf32>
    %25 = vector.broadcast %24 : vector<8x1x1xf32> to vector<8x8x1xf32>
    %26 = arith.divf %22, %25 : vector<8x8x1xf32>
    %c0_15 = arith.constant 0 : index
    %c0_16 = arith.constant 0 : index
    %c0_17 = arith.constant 0 : index
    %27 = vector.load %arg2[%c0_15, %c0_16, %c0_17] : memref<8x8x32xf32, #tpu.memory_space<vmem>>, vector<8x8x32xf32>
    %28 = vector.broadcast %26 : vector<8x8x1xf32> to vector<8x8x32xf32>
    %29 = arith.mulf %28, %27 : vector<8x8x32xf32>
    %cst_18 = arith.constant dense<0.000000e+00> : vector<8x32xf32>
    %30 = vector.multi_reduction <add>, %29, %cst_18 [1] : vector<8x8x32xf32> to vector<8x32xf32>
    %c0_19 = arith.constant 0 : index
    %c0_20 = arith.constant 0 : index
    %31 = vector.load %arg7[%c0_19, %c0_20] : memref<8x32xf32, #tpu.memory_space<vmem>>, vector<8x32xf32>
    tpu.vector_store %arg7[%c0_19, %c0_20], %30 {strides = array<i32>} : memref<8x32xf32, #tpu.memory_space<vmem>>, vector<8x32xf32>,
    return
  }
  func.func @transform_0(%arg0: i32) -> (i32, i32, i32) {
    %c0_i32 = arith.constant 0 : i32
    %c0_i32_0 = arith.constant 0 : i32
    %c0_i32_1 = arith.constant 0 : i32
    return %arg0, %c0_i32, %c0_i32_0 : i32, i32, i32
  }
  func.func @transform_1(%arg0: i32) -> (i32, i32, i32) {
    %c0_i32 = arith.constant 0 : i32
    %c0_i32_0 = arith.constant 0 : i32
    %c0_i32_1 = arith.constant 0 : i32
    return %arg0, %c0_i32, %c0_i32_0 : i32, i32, i32
  }
  func.func @transform_2(%arg0: i32) -> (i32, i32) {
    %c0_i32 = arith.constant 0 : i32
    %c0_i32_0 = arith.constant 0 : i32
    %c0_i32_1 = arith.constant 0 : i32
    return %c0_i32, %c0_i32_0 : i32, i32
  }
  func.func @transform_3(%arg0: i32) -> (i32, i32) {
    %c0_i32 = arith.constant 0 : i32
    %c0_i32_0 = arith.constant 0 : i32
    %c0_i32_1 = arith.constant 0 : i32
    return %c0_i32, %c0_i32_0 : i32, i32
  }
  func.func @transform_4(%arg0: i32) -> (i32, i32) {
    %c0_i32 = arith.constant 0 : i32
    %c0_i32_0 = arith.constant 0 : i32
    %c0_i32_1 = arith.constant 0 : i32
    return %c0_i32, %c0_i32_0 : i32, i32
  }
  func.func @transform_5(%arg0: i32) -> i32 {
    %c0_i32 = arith.constant 0 : i32
    %c0_i32_0 = arith.constant 0 : i32
    return %c0_i32 : i32
  }
  func.func @transform_6(%arg0: i32) -> (i32, i32) {
    %c0_i32 = arith.constant 0 : i32
    %c0_i32_0 = arith.constant 0 : i32
    return %arg0, %c0_i32 : i32, i32
  }
  func.func @transform_7(%arg0: i32) -> (i32, i32, i32) {
    %c0_i32 = arith.constant 0 : i32
    %c0_i32_0 = arith.constant 0 : i32
    %c0_i32_1 = arith.constant 0 : i32
    return %arg0, %c0_i32, %c0_i32_0 : i32, i32, i32
  }
}

</mosaic_0001>

<llo_original>
// kernel: tpu_custom_call.1
$region0: #{tpu_custom_call.1}
  #allocation0 [shape = 'u32[]', space=smem, size = 0x4, offset = 0x4, fixed_abs, tag = 'smem constant byte address 0x4 - core index']
  #allocation1 [shape = 'u32[144,128]{1,0:T(1,128)}', space=vmem, size = 0x12000, scoped, tag = 'internal scratch']
  #allocation2 [shape = 'f32[1]{0:T(128)S(6)}', space=smem, size = 0x200, scoped, tag = 'scoped memory for tpu_custom_call.1']
  %s0 = inlined_call_operand.hbm [shape: f32[8,8,32], index: 0, kind: input, shape index: {}]
  %s1 = inlined_call_operand.hbm [shape: f32[8,8,32], index: 1, kind: input, shape index: {}]
  %s2 = inlined_call_operand.hbm [shape: f32[32,64], index: 2, kind: input, shape index: {}]
  %s3 = inlined_call_operand.vmem [shape: f32[1,64], index: 3, kind: input, shape index: {}]
  %s4 = inlined_call_operand.vmem [shape: f32[1,64], index: 4, kind: input, shape index: {}]
  %s5 = inlined_call_operand.<no memory space> [shape: f32[1], index: 5, kind: input, shape index: {}]
  %s6 = inlined_call_operand.hbm [shape: f32[8,32], index: 6, kind: output, shape index: {0}]
  %s7 = inlined_call_operand.vmem [shape: f32[8,8,1], index: 7, kind: output, shape index: {1}]
  %8 = xla_tuple %s6, %s7
  %s9 = sld [smem:[#allocation0]]
  $region54: #{tpu_custom_call.1} parent=0
    _
  %s11 = ssub.s32 1, %s9
  %s12 = scalar_select 0, %s11, %s9
  %13 = sst [smem:[#allocation2]] %s5
  $region1: #{tpu_custom_call.1} parent=0
    #allocation3 [shape = 'u8[32768]{0}', space=vmem, size = 0x8000, scoped, tag = 'input window, operand 0, single buffered']
    #allocation4 [shape = 's32[1]{0}', space=sflag, size = 0x4, scoped, tag = 'scoped memory for tpu_custom_call.1']
    #allocation5 [shape = 's32[1]{0}', space=sflag, size = 0x4, scoped, tag = 'scoped memory for tpu_custom_call.1']
    #allocation6 [shape = 'u8[32768]{0}', space=vmem, size = 0x8000, scoped, tag = 'input window, operand 1, single buffered']
    #allocation7 [shape = 's32[1]{0}', space=sflag, size = 0x4, scoped, tag = 'scoped memory for tpu_custom_call.1']
    #allocation8 [shape = 'u8[16384]{0}', space=vmem, size = 0x4000, scoped, tag = 'input window, operand 2, single buffered']
    #allocation9 [shape = 'u8[4096]{0}', space=vmem, size = 0x1000, scoped, tag = 'output window, operand 0, single buffered']
    %14 = vsyncpa [#allocation4], 0
    %15 = vsyncpa [#allocation7], 0
    %16 = vsyncpa [#allocation5], 0
    // Predicated region
    $region2: #{tpu_custom_call.1} parent=1 // pred_check
      _
    $region3: #{tpu_custom_call.1} parent=1 // pred_check_branch
      %18 = sbr.rel (0) target = $region5
    $region4: #{tpu_custom_call.1} parent=1 // pred_region
      %s20 = ssub.s32 1024, 1024
      %21 = vsyncadd [#allocation4], %s20
      %s22 = sshll.u32 [#allocation3], 4
      %s23 = int_to_ptr.vmem [resolvable:$true] %s22
      %28 = dma.hbm_to_vmem [thread:$0]  %s0, 1024, %s23, [#allocation4], 128, 128, 8
    $region5: #{tpu_custom_call.1} parent=1 // pred_fallthru
      _
    // Predicated region
    $region6: #{tpu_custom_call.1} parent=1 // pred_check
      _
    $region7: #{tpu_custom_call.1} parent=1 // pred_check_branch
      %30 = sbr.rel (0) target = $region9
    $region8: #{tpu_custom_call.1} parent=1 // pred_region
      %s32 = ssub.s32 1024, 1024
      %33 = vsyncadd [#allocation7], %s32
      %s34 = sshll.u32 [#allocation6], 4
      %s35 = int_to_ptr.vmem [resolvable:$true] %s34
      %40 = dma.hbm_to_vmem [thread:$0]  %s1, 1024, %s35, [#allocation7], 128, 128, 8
    $region9: #{tpu_custom_call.1} parent=1 // pred_fallthru
      _
    // Predicated region
    $region10: #{tpu_custom_call.1} parent=1 // pred_check
      _
    $region11: #{tpu_custom_call.1} parent=1 // pred_check_branch
      %42 = sbr.rel (0) target = $region13
    $region12: #{tpu_custom_call.1} parent=1 // pred_region
      %s44 = ssub.s32 512, 512
      %45 = vsyncadd [#allocation7], %s44
      %s46 = sshll.u32 [#allocation8], 4
      %s47 = int_to_ptr.vmem [resolvable:$true] %s46
      %52 = dma.hbm_to_vmem [thread:$0]  %s2, 512, %s47, [#allocation7], 128, 128, 8
    $region13: #{tpu_custom_call.1} parent=1 // pred_fallthru
      _
    // Predicated region
    $region14: #{tpu_custom_call.1} parent=1 // pred_check
      _
    $region15: #{tpu_custom_call.1} parent=1 // pred_check_branch
      %54 = sbr.rel (0) target = $region17
    $region16: #{tpu_custom_call.1} parent=1 // pred_region
      _
    $region17: #{tpu_custom_call.1} parent=1 // pred_fallthru
      _
    // Predicated region
    $region18: #{tpu_custom_call.1} parent=1 // pred_check
      _
    $region19: #{tpu_custom_call.1} parent=1 // pred_check_branch
      %56 = sbr.rel (0) target = $region21
    $region20: #{tpu_custom_call.1} parent=1 // pred_region
      _
    $region21: #{tpu_custom_call.1} parent=1 // pred_fallthru
      _
    // Predicated region
    $region22: #{tpu_custom_call.1} parent=1 // pred_check
      _
    $region23: #{tpu_custom_call.1} parent=1 // pred_check_branch
      %58 = sbr.rel (0) target = $region25
    $region24: #{tpu_custom_call.1} parent=1 // pred_region
      _
    $region25: #{tpu_custom_call.1} parent=1 // pred_fallthru
      _
    // Predicated region
    $region26: #{tpu_custom_call.1} parent=1 // pred_check
      _
    $region27: #{tpu_custom_call.1} parent=1 // pred_check_branch
      %60 = sbr.rel (0) target = $region29
    $region28: #{tpu_custom_call.1} parent=1 // pred_region
      %61 = dma.done [#allocation4], 1024
    $region29: #{tpu_custom_call.1} parent=1 // pred_fallthru
      _
    // Predicated region
    $region30: #{tpu_custom_call.1} parent=1 // pred_check
      _
    $region31: #{tpu_custom_call.1} parent=1 // pred_check_branch
      %63 = sbr.rel (0) target = $region33
    $region32: #{tpu_custom_call.1} parent=1 // pred_region
      %64 = dma.done [#allocation7], 1024
    $region33: #{tpu_custom_call.1} parent=1 // pred_fallthru
      _
    // Predicated region
    $region34: #{tpu_custom_call.1} parent=1 // pred_check
      _
    $region35: #{tpu_custom_call.1} parent=1 // pred_check_branch
      %66 = sbr.rel (0) target = $region37
    $region36: #{tpu_custom_call.1} parent=1 // pred_region
      %67 = dma.done [#allocation7], 512
    $region37: #{tpu_custom_call.1} parent=1 // pred_fallthru
      _
    %v68 = vld [vmem:[#allocation3] sm:$0xff]
    %v69 = vld [vmem:[#allocation3 + $0x8] sm:$0xff]
    %v70 = vld [vmem:[#allocation3 + $0x10] sm:$0xff]
    %v71 = vld [vmem:[#allocation3 + $0x18] sm:$0xff]
    %v72 = vld [vmem:[#allocation3 + $0x20] sm:$0xff]
    %v73 = vld [vmem:[#allocation3 + $0x28] sm:$0xff]
    %v74 = vld [vmem:[#allocation3 + $0x30] sm:$0xff]
    %v75 = vld [vmem:[#allocation3 + $0x38] sm:$0xff]
    %v76 = vld [vmem:[#allocation8] sm:$0xff]
    %v77 = vld [vmem:[#allocation8 + $0x8] sm:$0xff]
    %v78 = vld [vmem:[#allocation8 + $0x10] sm:$0xff]
    %v79 = vld [vmem:[#allocation8 + $0x18] sm:$0xff]
    %v80 = vld [vmem:[%s3] sm:$0x1]
    %v82 = vlaneseq
    %v83 = vshrl.u32 %v82, 7
    %v84 = vsub.s32 0, %v83
    %v85 = vrot.slane %v80, %v84
    %vm87 = vcmask 261120
    %v89 = vsel %vm87, %v68, 0
    %v92 = vsel %vm87, %v69, 0
    %v95 = vsel %vm87, %v70, 0
    %v98 = vsel %vm87, %v71, 0
    %v101 = vsel %vm87, %v72, 0
    %v104 = vsel %vm87, %v73, 0
    %v107 = vsel %vm87, %v74, 0
    %v110 = vsel %vm87, %v75, 0
    %112 = vmatprep.subr.mxu0 0.0
    %113 = vmatpush1.msra.mxu0 %v76
    %114 = vmatprep.subr.mxu0 0.0
    %115 = vmatpush1.msra.mxu0 %v77
    %116 = vmatprep.subr.mxu0 0.0
    %117 = vmatpush1.msra.mxu0 %v78
    %118 = vmatprep.subr.mxu0 0.0
    %119 = vmatpush1.msra.mxu0 %v79
    %120 = vmatprep.subr.mxu0 0.0
    %121 = vmatpush1.msra.mxu0 0.0
    %122 = vmatprep.subr.mxu0 0.0
    %123 = vmatpush1.msra.mxu0 0.0
    %124 = vmatprep.subr.mxu0 0.0
    %125 = vmatpush1.msra.mxu0 0.0
    %126 = vmatprep.subr.mxu0 0.0
    %127 = vmatpush1.msra.mxu0 0.0
    %128 = vmatprep.subr.mxu0 0.0
    %129 = vmatpush1.msra.mxu0 0.0
    %130 = vmatprep.subr.mxu0 0.0
    %131 = vmatpush1.msra.mxu0 0.0
    %132 = vmatprep.subr.mxu0 0.0
    %133 = vmatpush1.msra.mxu0 0.0
    %134 = vmatprep.subr.mxu0 0.0
    %135 = vmatpush1.msra.mxu0 0.0
    %136 = vmatprep.subr.mxu0 0.0
    %137 = vmatpush1.msra.mxu0 0.0
    %138 = vmatprep.subr.mxu0 0.0
    %139 = vmatpush1.msra.mxu0 0.0
    %140 = vmatprep.subr.mxu0 0.0
    %141 = vmatpush1.msra.mxu0 0.0
    %142 = vmatprep.subr.mxu0 0.0
    %143 = vmatpush1.msra.mxu0 0.0
    %144 = vmatprep.subr.mxu0 0.0
    %145 = vmatpush1.msra.mxu0 0.0
    %146 = vmatprep.subr.mxu0 0.0
    %147 = vmatpush1.msra.mxu0 0.0
    %148 = vmatprep.subr.mxu0 0.0
    %149 = vmatpush1.msra.mxu0 0.0
    %150 = vmatprep.subr.mxu0 0.0
    %151 = vmatpush1.msra.mxu0 0.0
    %152 = vmatprep.subr.mxu0 0.0
    %153 = vmatpush1.msra.mxu0 0.0
    %154 = vmatprep.subr.mxu0 0.0
    %155 = vmatpush1.msra.mxu0 0.0
    %156 = vmatprep.subr.mxu0 0.0
    %157 = vmatpush1.msra.mxu0 0.0
    %158 = vmatprep.subr.mxu0 0.0
    %159 = vmatpush1.msra.mxu0 0.0
    %160 = vmatprep.subr.mxu0 0.0
    %161 = vmatpush1.msra.mxu0 0.0
    %162 = vmatprep.subr.mxu0 0.0
    %163 = vmatpush1.msra.mxu0 0.0
    %164 = vmatprep.subr.mxu0 0.0
    %165 = vmatpush1.msra.mxu0 0.0
    %166 = vmatprep.subr.mxu0 0.0
    %167 = vmatpush1.msra.mxu0 0.0
    %168 = vmatprep.subr.mxu0 0.0
    %169 = vmatpush1.msra.mxu0 0.0
    %170 = vmatprep.subr.mxu0 0.0
    %171 = vmatpush1.msra.mxu0 0.0
    %172 = vmatprep.subr.mxu0 0.0
    %173 = vmatpush1.msra.mxu0 0.0
    %174 = vmatprep.subr.mxu0 0.0
    %175 = vmatpush1.msra.mxu0 0.0
    %176 = vmatprep.mubr.f32.mxu0 0.0
    %177 = vmatmul.mubr.f32.gmra.mrb[0].mxu0 %v89
    %v178 = vpop.f32.mrb[0].mxu0
    %v179 = vadd.f32 %v85, %v178
    %v180 = vpop.f32.mrb[0].mxu0
    %181 = vmatprep.mubr.f32.mxu0 0.0
    %182 = vmatmul.mubr.f32.gmra.mrb[0].mxu0 %v92
    %v183 = vpop.f32.mrb[0].mxu0
    %v184 = vadd.f32 %v85, %v183
    %v185 = vpop.f32.mrb[0].mxu0
    %186 = vmatprep.mubr.f32.mxu0 0.0
    %187 = vmatmul.mubr.f32.gmra.mrb[0].mxu0 %v95
    %v188 = vpop.f32.mrb[0].mxu0
    %v189 = vadd.f32 %v85, %v188
    %v190 = vpop.f32.mrb[0].mxu0
    %191 = vmatprep.mubr.f32.mxu0 0.0
    %192 = vmatmul.mubr.f32.gmra.mrb[0].mxu0 %v98
    %v193 = vpop.f32.mrb[0].mxu0
    %v194 = vadd.f32 %v85, %v193
    %v195 = vpop.f32.mrb[0].mxu0
    %196 = vmatprep.mubr.f32.mxu0 0.0
    %197 = vmatmul.mubr.f32.gmra.mrb[0].mxu0 %v101
    %v198 = vpop.f32.mrb[0].mxu0
    %v199 = vadd.f32 %v85, %v198
    %v200 = vpop.f32.mrb[0].mxu0
    %201 = vmatprep.mubr.f32.mxu0 0.0
    %202 = vmatmul.mubr.f32.gmra.mrb[0].mxu0 %v104
    %v203 = vpop.f32.mrb[0].mxu0
    %v204 = vadd.f32 %v85, %v203
    %v205 = vpop.f32.mrb[0].mxu0
    %206 = vmatprep.mubr.f32.mxu0 0.0
    %207 = vmatmul.mubr.f32.gmra.mrb[0].mxu0 %v107
    %v208 = vpop.f32.mrb[0].mxu0
    %v209 = vadd.f32 %v85, %v208
    %v210 = vpop.f32.mrb[0].mxu0
    %211 = vmatprep.mubr.f32.mxu0 0.0
    %212 = vmatmul.mubr.f32.gmra.mrb[0].mxu0 %v110
    %v213 = vpop.f32.mrb[0].mxu0
    %v214 = vadd.f32 %v85, %v213
    %v215 = vpop.f32.mrb[0].mxu0
    %216 = vdwg.mxu0
    %v217 = vtanh.pop %v179
    %v218 = vtanh.pop %v184
    %v219 = vtanh.pop %v189
    %v220 = vtanh.pop %v194
    %v221 = vtanh.pop %v199
    %v222 = vtanh.pop %v204
    %v223 = vtanh.pop %v209
    %v224 = vtanh.pop %v214
    %v225 = vld [vmem:[%s4] sm:$0x1]
    %v227 = vlaneseq
    %v228 = vshrl.u32 %v227, 7
    %v229 = vsub.s32 0, %v228
    %v230 = vrot.slane %v225, %v229
    %v232 = vmul.f32 %v217, %v230
    %v233 = vmul.f32 %v218, %v230
    %v234 = vmul.f32 %v219, %v230
    %v235 = vmul.f32 %v220, %v230
    %v236 = vmul.f32 %v221, %v230
    %v237 = vmul.f32 %v222, %v230
    %v238 = vmul.f32 %v223, %v230
    %v239 = vmul.f32 %v224, %v230
    %vm240 = vcmask 523264
    %v241 = vsel %vm240, %v232, 0.0
    %242 = vadd.xlane.f32.xlu0 %v241
    %v243 = vpop.xlane.xlu0 %242
    %v244 = vsel %vm240, %v233, 0.0
    %245 = vadd.xlane.f32.xlu0 %v244
    %v246 = vpop.xlane.xlu0 %245
    %v247 = vsel %vm240, %v234, 0.0
    %248 = vadd.xlane.f32.xlu0 %v247
    %v249 = vpop.xlane.xlu0 %248
    %v250 = vsel %vm240, %v235, 0.0
    %251 = vadd.xlane.f32.xlu0 %v250
    %v252 = vpop.xlane.xlu0 %251
    %v253 = vsel %vm240, %v236, 0.0
    %254 = vadd.xlane.f32.xlu0 %v253
    %v255 = vpop.xlane.xlu0 %254
    %v256 = vsel %vm240, %v237, 0.0
    %257 = vadd.xlane.f32.xlu0 %v256
    %v258 = vpop.xlane.xlu0 %257
    %v259 = vsel %vm240, %v238, 0.0
    %260 = vadd.xlane.f32.xlu0 %v259
    %v261 = vpop.xlane.xlu0 %260
    %v262 = vsel %vm240, %v239, 0.0
    %263 = vadd.xlane.f32.xlu0 %v262
    %v264 = vpop.xlane.xlu0 %263
    %s265 = sld [smem:[#allocation2]]
    %v266 = vstv %s265
    %v267 = vadd.f32 %v243, %v266
    %v268 = vadd.f32 %v246, %v266
    %v269 = vadd.f32 %v249, %v266
    %v270 = vadd.f32 %v252, %v266
    %v271 = vadd.f32 %v255, %v266
    %v272 = vadd.f32 %v258, %v266
    %v273 = vadd.f32 %v261, %v266
    %v274 = vadd.f32 %v264, %v266
    %vm275 = vcmask 7168
    %276 = vst.msk [vmem:[%s7] sm:$0xff] %vm275, %v267
    %277 = vst.msk [vmem:[%s7 + $0x8] sm:$0xff] %vm275, %v268
    %278 = vst.msk [vmem:[%s7 + $0x10] sm:$0xff] %vm275, %v269
    %279 = vst.msk [vmem:[%s7 + $0x18] sm:$0xff] %vm275, %v270
    %280 = vst.msk [vmem:[%s7 + $0x20] sm:$0xff] %vm275, %v271
    %281 = vst.msk [vmem:[%s7 + $0x28] sm:$0xff] %vm275, %v272
    %282 = vst.msk [vmem:[%s7 + $0x30] sm:$0xff] %vm275, %v273
    %283 = vst.msk [vmem:[%s7 + $0x38] sm:$0xff] %vm275, %v274
    %v284 = vrot.slane %v267, 4
    %v285 = vmax.f32 %v267, %v284
    %v286 = vrot.slane %v285, 2
    %v287 = vmax.f32 %v285, %v286
    %v288 = vrot.slane %v287, 1
    %v289 = vmax.f32 %v287, %v288
    %v290 = vrot.slane %v268, 4
    %v291 = vmax.f32 %v268, %v290
    %v292 = vrot.slane %v291, 2
    %v293 = vmax.f32 %v291, %v292
    %v294 = vrot.slane %v293, 1
    %v295 = vmax.f32 %v293, %v294
    %v296 = vrot.slane %v269, 4
    %v297 = vmax.f32 %v269, %v296
    %v298 = vrot.slane %v297, 2
    %v299 = vmax.f32 %v297, %v298
    %v300 = vrot.slane %v299, 1
    %v301 = vmax.f32 %v299, %v300
    %v302 = vrot.slane %v270, 4
    %v303 = vmax.f32 %v270, %v302
    %v304 = vrot.slane %v303, 2
    %v305 = vmax.f32 %v303, %v304
    %v306 = vrot.slane %v305, 1
    %v307 = vmax.f32 %v305, %v306
    %v308 = vrot.slane %v271, 4
    %v309 = vmax.f32 %v271, %v308
    %v310 = vrot.slane %v309, 2
    %v311 = vmax.f32 %v309, %v310
    %v312 = vrot.slane %v311, 1
    %v313 = vmax.f32 %v311, %v312
    %v314 = vrot.slane %v272, 4
    %v315 = vmax.f32 %v272, %v314
    %v316 = vrot.slane %v315, 2
    %v317 = vmax.f32 %v315, %v316
    %v318 = vrot.slane %v317, 1
    %v319 = vmax.f32 %v317, %v318
    %v320 = vrot.slane %v273, 4
    %v321 = vmax.f32 %v273, %v320
    %v322 = vrot.slane %v321, 2
    %v323 = vmax.f32 %v321, %v322
    %v324 = vrot.slane %v323, 1
    %v325 = vmax.f32 %v323, %v324
    %v326 = vrot.slane %v274, 4
    %v327 = vmax.f32 %v274, %v326
    %v328 = vrot.slane %v327, 2
    %v329 = vmax.f32 %v327, %v328
    %v330 = vrot.slane %v329, 1
    %v331 = vmax.f32 %v329, %v330
    %v332 = vsub.f32 %v267, %v289
    %v333 = vsub.f32 %v268, %v295
    %v334 = vsub.f32 %v269, %v301
    %v335 = vsub.f32 %v270, %v307
    %v336 = vsub.f32 %v271, %v313
    %v337 = vsub.f32 %v272, %v319
    %v338 = vsub.f32 %v273, %v325
    %v339 = vsub.f32 %v274, %v331
    %v340 = vmul.f32 %v332, 1.442695
    %v341 = vpow.pop %v340
    %v342 = vmul.f32 %v333, 1.442695
    %v343 = vpow.pop %v342
    %v344 = vmul.f32 %v334, 1.442695
    %v345 = vpow.pop %v344
    %v346 = vmul.f32 %v335, 1.442695
    %v347 = vpow.pop %v346
    %v348 = vmul.f32 %v336, 1.442695
    %v349 = vpow.pop %v348
    %v350 = vmul.f32 %v337, 1.442695
    %v351 = vpow.pop %v350
    %v352 = vmul.f32 %v338, 1.442695
    %v353 = vpow.pop %v352
    %v354 = vmul.f32 %v339, 1.442695
    %v355 = vpow.pop %v354
    %v356 = vrot.slane %v341, 4
    %v357 = vadd.f32 %v341, %v356
    %v358 = vrot.slane %v357, 2
    %v359 = vadd.f32 %v357, %v358
    %v360 = vrot.slane %v359, 1
    %v361 = vadd.f32 %v359, %v360
    %v362 = vrot.slane %v343, 4
    %v363 = vadd.f32 %v343, %v362
    %v364 = vrot.slane %v363, 2
    %v365 = vadd.f32 %v363, %v364
    %v366 = vrot.slane %v365, 1
    %v367 = vadd.f32 %v365, %v366
    %v368 = vrot.slane %v345, 4
    %v369 = vadd.f32 %v345, %v368
    %v370 = vrot.slane %v369, 2
    %v371 = vadd.f32 %v369, %v370
    %v372 = vrot.slane %v371, 1
    %v373 = vadd.f32 %v371, %v372
    %v374 = vrot.slane %v347, 4
    %v375 = vadd.f32 %v347, %v374
    %v376 = vrot.slane %v375, 2
    %v377 = vadd.f32 %v375, %v376
    %v378 = vrot.slane %v377, 1
    %v379 = vadd.f32 %v377, %v378
    %v380 = vrot.slane %v349, 4
    %v381 = vadd.f32 %v349, %v380
    %v382 = vrot.slane %v381, 2
    %v383 = vadd.f32 %v381, %v382
    %v384 = vrot.slane %v383, 1
    %v385 = vadd.f32 %v383, %v384
    %v386 = vrot.slane %v351, 4
    %v387 = vadd.f32 %v351, %v386
    %v388 = vrot.slane %v387, 2
    %v389 = vadd.f32 %v387, %v388
    %v390 = vrot.slane %v389, 1
    %v391 = vadd.f32 %v389, %v390
    %v392 = vrot.slane %v353, 4
    %v393 = vadd.f32 %v353, %v392
    %v394 = vrot.slane %v393, 2
    %v395 = vadd.f32 %v393, %v394
    %v396 = vrot.slane %v395, 1
    %v397 = vadd.f32 %v395, %v396
    %v398 = vrot.slane %v355, 4
    %v399 = vadd.f32 %v355, %v398
    %v400 = vrot.slane %v399, 2
    %v401 = vadd.f32 %v399, %v400
    %v402 = vrot.slane %v401, 1
    %v403 = vadd.f32 %v401, %v402
    %v404 = vrcp.pop %v361
    %v405 = vmul.f32 %v341, %v404
    %v406 = vrcp.pop %v367
    %v407 = vmul.f32 %v343, %v406
    %v408 = vrcp.pop %v373
    %v409 = vmul.f32 %v345, %v408
    %v410 = vrcp.pop %v379
    %v411 = vmul.f32 %v347, %v410
    %v412 = vrcp.pop %v385
    %v413 = vmul.f32 %v349, %v412
    %v414 = vrcp.pop %v391
    %v415 = vmul.f32 %v351, %v414
    %v416 = vrcp.pop %v397
    %v417 = vmul.f32 %v353, %v416
    %v418 = vrcp.pop %v403
    %v419 = vmul.f32 %v355, %v418
    %v420 = vld [vmem:[#allocation6] sm:$0xff]
    %v421 = vld [vmem:[#allocation6 + $0x8] sm:$0xff]
    %v422 = vld [vmem:[#allocation6 + $0x10] sm:$0xff]
    %v423 = vld [vmem:[#allocation6 + $0x18] sm:$0xff]
    %v424 = vld [vmem:[#allocation6 + $0x20] sm:$0xff]
    %v425 = vld [vmem:[#allocation6 + $0x28] sm:$0xff]
    %v426 = vld [vmem:[#allocation6 + $0x30] sm:$0xff]
    %v427 = vld [vmem:[#allocation6 + $0x38] sm:$0xff]
    %v428 = vmul.f32 %v405, %v420
    %v429 = vmul.f32 %v407, %v421
    %v430 = vmul.f32 %v409, %v422
    %v431 = vmul.f32 %v411, %v423
    %v432 = vmul.f32 %v413, %v424
    %v433 = vmul.f32 %v415, %v425
    %v434 = vmul.f32 %v417, %v426
    %v435 = vmul.f32 %v419, %v427
    %v436 = vsel %vm87, %v428, 0.0
    %v437 = vrot.slane %v436, 4
    %v438 = vadd.f32 %v436, %v437
    %v439 = vrot.slane %v438, 2
    %v440 = vadd.f32 %v438, %v439
    %v441 = vrot.slane %v440, 1
    %v442 = vadd.f32 %v440, %v441
    %v443 = vsel %vm87, %v429, 0.0
    %v444 = vrot.slane %v443, 4
    %v445 = vadd.f32 %v443, %v444
    %v446 = vrot.slane %v445, 2
    %v447 = vadd.f32 %v445, %v446
    %v448 = vrot.slane %v447, 1
    %v449 = vadd.f32 %v447, %v448
    %v450 = vsel %vm87, %v430, 0.0
    %v451 = vrot.slane %v450, 4
    %v452 = vadd.f32 %v450, %v451
    %v453 = vrot.slane %v452, 2
    %v454 = vadd.f32 %v452, %v453
    %v455 = vrot.slane %v454, 1
    %v456 = vadd.f32 %v454, %v455
    %v457 = vsel %vm87, %v431, 0.0
    %v458 = vrot.slane %v457, 4
    %v459 = vadd.f32 %v457, %v458
    %v460 = vrot.slane %v459, 2
    %v461 = vadd.f32 %v459, %v460
    %v462 = vrot.slane %v461, 1
    %v463 = vadd.f32 %v461, %v462
    %v464 = vsel %vm87, %v432, 0.0
    %v465 = vrot.slane %v464, 4
    %v466 = vadd.f32 %v464, %v465
    %v467 = vrot.slane %v466, 2
    %v468 = vadd.f32 %v466, %v467
    %v469 = vrot.slane %v468, 1
    %v470 = vadd.f32 %v468, %v469
    %v471 = vsel %vm87, %v433, 0.0
    %v472 = vrot.slane %v471, 4
    %v473 = vadd.f32 %v471, %v472
    %v474 = vrot.slane %v473, 2
    %v475 = vadd.f32 %v473, %v474
    %v476 = vrot.slane %v475, 1
    %v477 = vadd.f32 %v475, %v476
    %v478 = vsel %vm87, %v434, 0.0
    %v479 = vrot.slane %v478, 4
    %v480 = vadd.f32 %v478, %v479
    %v481 = vrot.slane %v480, 2
    %v482 = vadd.f32 %v480, %v481
    %v483 = vrot.slane %v482, 1
    %v484 = vadd.f32 %v482, %v483
    %v485 = vsel %vm87, %v435, 0.0
    %v486 = vrot.slane %v485, 4
    %v487 = vadd.f32 %v485, %v486
    %v488 = vrot.slane %v487, 2
    %v489 = vadd.f32 %v487, %v488
    %v490 = vrot.slane %v489, 1
    %v491 = vadd.f32 %v489, %v490
    %vm500 = vcmask 1041409
    %v501 = vsel %vm500, %v449, %v442
    %vm502 = vcmask 1042434
    %v503 = vsel %vm502, %v456, %v501
    %vm504 = vcmask 1043459
    %v505 = vsel %vm504, %v463, %v503
    %vm506 = vcmask 1044484
    %v507 = vsel %vm506, %v470, %v505
    %vm508 = vcmask 1045509
    %v509 = vsel %vm508, %v477, %v507
    %vm510 = vcmask 1046534
    %v511 = vsel %vm510, %v484, %v509
    %vm512 = vcmask 1047559
    %v513 = vsel %vm512, %v491, %v511
    %515 = vst.msk [vmem:[#allocation9] sm:$0xff] %vm87, %v513
    // Predicated region
    $region38: #{tpu_custom_call.1} parent=1 // pred_check
      _
    $region39: #{tpu_custom_call.1} parent=1 // pred_check_branch
      %517 = sbr.rel (0) target = $region41
    $region40: #{tpu_custom_call.1} parent=1 // pred_region
      %s519 = ssub.s32 128, 128
      %520 = vsyncadd [#allocation5], %s519
      %s522 = sshll.u32 [#allocation9], 4
      %s523 = int_to_ptr.vmem [resolvable:$true] %s522
      %525 = dma.vmem_to_hbm [thread:$0]  %s523, 128, %s6, [#allocation5]
    $region41: #{tpu_custom_call.1} parent=1 // pred_fallthru
      _
    // Predicated region
    $region42: #{tpu_custom_call.1} parent=1 // pred_check
      _
    $region43: #{tpu_custom_call.1} parent=1 // pred_check_branch
      %527 = sbr.rel (0) target = $region45
    $region44: #{tpu_custom_call.1} parent=1 // pred_region
      _
    $region45: #{tpu_custom_call.1} parent=1 // pred_fallthru
      _
    // Predicated region
    $region46: #{tpu_custom_call.1} parent=1 // pred_check
      _
    $region47: #{tpu_custom_call.1} parent=1 // pred_check_branch
      %529 = sbr.rel (0) target = $region49
    $region48: #{tpu_custom_call.1} parent=1 // pred_region
      %530 = dma.done [#allocation5], 128
    $region49: #{tpu_custom_call.1} parent=1 // pred_fallthru
      _
    // Predicated region
    $region50: #{tpu_custom_call.1} parent=1 // pred_check
      _
    $region51: #{tpu_custom_call.1} parent=1 // pred_check_branch
      %532 = sbr.rel (0) target = $region53
    $region52: #{tpu_custom_call.1} parent=1 // pred_region
      _
    $region53: #{tpu_custom_call.1} parent=1 // pred_fallthru
      _
    %533 = vsyncpa [#allocation4], 1
    %534 = vsyncpa [#allocation7], 1
    %535 = vsyncpa [#allocation5], 1

</llo_original>
